<compile_context>
chip_gen: v5e
topology: v5e:2x2
jax: 0.10.0
libtpu: 0.0.40
codegen_flags: <defaults>
</compile_context>

<pallas_src>
import math

import jax
import jax.numpy as jnp
from jax.experimental import pallas as pl
from jax.experimental.pallas import tpu as pltpu

_LANES = 128
_SUBLANES = 8


def _round_up(x, m):
    return (x + m - 1) // m * m


# ---------------------------------------------------------------------------
# Stage 1: xw = x @ W + bias   (tiled over row blocks of x)
# ---------------------------------------------------------------------------
def _xw_kernel(x_ref, w_ref, b_ref, o_ref):
    xw = jnp.dot(x_ref[...], w_ref[...], preferred_element_type=jnp.float32)
    o_ref[...] = (xw + b_ref[...]).astype(o_ref.dtype)


# ---------------------------------------------------------------------------
# Stage 2: out = G @ xw   (row tiles i, reduction tiles k, f32 accumulator)
# ---------------------------------------------------------------------------
def _spmm_kernel(g_ref, xw_ref, o_ref, acc_ref):
    @pl.when(pl.program_id(1) == 0)
    def _():
        acc_ref[...] = jnp.zeros_like(acc_ref)

    acc_ref[...] += jnp.dot(g_ref[...], xw_ref[...],
                            preferred_element_type=jnp.float32)

    @pl.when(pl.program_id(1) == pl.num_programs(1) - 1)
    def _():
        o_ref[...] = acc_ref[...].astype(o_ref.dtype)


def hgnn_conv(x, G, weight, bias, *, tm=256, tk=1024,
              compute_dtype=jnp.float32):
    """Pallas implementation of HGNN_conv.forward(x, G).

    tm: output row-tile size (multiple of 8).    Default sized for v7x VMEM.
    tk: reduction (k over N) tile size (multiple of 128).
    compute_dtype: dtype of G / xw fed to the MXU (f32 matches the module;
                   bf16 halves HBM traffic of the bandwidth-bound G stream).
    """
    N, in_ft = x.shape
    out_ft = weight.shape[1]
    cdt = jnp.dtype(compute_dtype)

    x = x.astype(jnp.float32)
    weight = weight.astype(jnp.float32)
    bias = bias.astype(jnp.float32)
    G = G.astype(cdt)  # module semantics: G.to(float32); optionally bf16.

    # Lane-dense output: pad out_ft up to a multiple of 128.
    outp = _round_up(out_ft, _LANES)

    # Clamp tiles to the (aligned) problem size.
    tm = min(tm, _round_up(N, _SUBLANES))
    tk = min(tk, _round_up(N, _LANES))
    nr = _round_up(N, tm)   # padded rows of G / output
    nc = _round_up(N, tk)   # padded cols of G == padded rows of xw

    # Zero-padding.  Padded xw rows equal `bias`, but the matching padded G
    # columns are zero, so they contribute nothing to real output rows.
    w_p = jnp.zeros((in_ft, outp), jnp.float32).at[:, :out_ft].set(weight)
    b_p = jnp.zeros((1, outp), jnp.float32).at[0, :out_ft].set(bias)
    x_p = x if nc == N else jnp.zeros((nc, in_ft), jnp.float32).at[:N].set(x)
    g_p = G if (nr, nc) == (N, N) else (
        jnp.zeros((nr, nc), cdt).at[:N, :N].set(G))

    itm = cdt.itemsize

    # -------------------- stage 1: xw = x @ W + bias -----------------------
    xw = pl.pallas_call(
        _xw_kernel,
        out_shape=jax.ShapeDtypeStruct((nc, outp), cdt),
        grid=(nc // tk,),
        in_specs=[
            pl.BlockSpec((tk, in_ft), lambda i: (i, 0)),     # x rows
            pl.BlockSpec((in_ft, outp), lambda i: (0, 0)),   # W (resident)
            pl.BlockSpec((1, outp), lambda i: (0, 0)),       # bias (resident)
        ],
        out_specs=pl.BlockSpec((tk, outp), lambda i: (i, 0)),
        compiler_params=pltpu.CompilerParams(
            dimension_semantics=("parallel",)),
        cost_estimate=pl.CostEstimate(
            flops=2 * nc * in_ft * outp,
            transcendentals=0,
            bytes_accessed=4 * (nc * in_ft + in_ft * outp + outp)
            + itm * nc * outp),
    )(x_p, w_p, b_p)

    # -------------------- stage 2: out = G @ xw ----------------------------
    out_p = pl.pallas_call(
        _spmm_kernel,
        out_shape=jax.ShapeDtypeStruct((nr, outp), jnp.float32),
        grid=(nr // tm, nc // tk),                           # k (reduction) last
        in_specs=[
            pl.BlockSpec((tm, tk), lambda i, k: (i, k)),     # G tile
            pl.BlockSpec((tk, outp), lambda i, k: (k, 0)),   # xw rows
        ],
        out_specs=pl.BlockSpec((tm, outp), lambda i, k: (i, 0)),
        scratch_shapes=[pltpu.VMEM((tm, outp), jnp.float32)],
        compiler_params=pltpu.CompilerParams(
            dimension_semantics=("parallel", "arbitrary")),
        cost_estimate=pl.CostEstimate(
            flops=2 * nr * nc * outp,
            transcendentals=0,
            bytes_accessed=itm * (nr * nc + nc * outp) + 4 * nr * outp),
    )(g_p, xw)

    # Slice padding off.
    return out_p[:N, :out_ft]


if __name__ == "__main__":
    # Small, module-consistent shapes: N nodes, in_ft -> out_ft features.
    N, in_ft, out_ft = 16, 32, 16

    key = jax.random.PRNGKey(0)
    kx, kg, kw, kb = jax.random.split(key, 4)

    x = jax.random.normal(kx, (N, in_ft), dtype=jnp.float32)
    G = jax.random.uniform(kg, (N, N), dtype=jnp.float32)

    # Parameter init mirroring reset_parameters(): uniform(-stdv, stdv).
    stdv = 1.0 / math.sqrt(out_ft)
    weight = jax.random.uniform(kw, (in_ft, out_ft), dtype=jnp.float32,
                                minval=-stdv, maxval=stdv)
    bias = jax.random.uniform(kb, (out_ft,), dtype=jnp.float32,
                              minval=-stdv, maxval=stdv)

    out = hgnn_conv(x, G, weight, bias)
    out = jax.block_until_ready(out)

    # Pure-JAX reference check.
    ref = G.astype(jnp.float32) @ (x @ weight + bias)
    assert out.shape == (N, out_ft)
    assert jnp.allclose(out, ref, atol=1e-4, rtol=1e-4), "mismatch vs reference"

    print("KERNEL_OK")
</pallas_src>

<mosaic_0001>
module attributes {stable_mosaic.version = 11 : i64} {
  func.func @_xw_kernel(%arg0: i32, %arg1: memref<128x32xf32, #tpu.memory_space<vmem>>, %arg2: memref<32x128xf32, #tpu.memory_space<vmem>>, %arg3: memref<1x128xf32, #tpu.memory_space<vmem>>, %arg4: memref<128x128xf32, #tpu.memory_space<vmem>>) attributes {dimension_semantics = [#tpu.dimension_semantics<parallel>], iteration_bounds = array<i64: 1>, scalar_prefetch = 0 : i64, scratch_operands = 0 : i64, tpu.core_type = #tpu.core_type<tc>, window_params = [{transform_indices = @transform_0, window_bounds = array<i64: 128, 32>}, {pipeline_mode = #tpu.pipeline_mode<synchronous>, transform_indices = @transform_1, window_bounds = array<i64: 32, 128>}, {pipeline_mode = #tpu.pipeline_mode<synchronous>, transform_indices = @transform_2, window_bounds = array<i64: 1, 128>}, {transform_indices = @transform_3, window_bounds = array<i64: 128, 128>}]} {
    %c0 = arith.constant 0 : index
    %c0_0 = arith.constant 0 : index
    %0 = vector.load %arg1[%c0, %c0_0] : memref<128x32xf32, #tpu.memory_space<vmem>>, vector<128x32xf32>
    %c0_1 = arith.constant 0 : index
    %c0_2 = arith.constant 0 : index
    %1 = vector.load %arg2[%c0_1, %c0_2] : memref<32x128xf32, #tpu.memory_space<vmem>>, vector<32x128xf32>
    %cst = arith.constant dense<0.000000e+00> : vector<128x128xf32>
    %2 = tpu.matmul %0, %1, %cst {dimension_numbers = #tpu.dot_dimension_numbers<[1], [0], [0], [1], [0, 0, 1, 1], [], []>} : vector<128x32xf32>, vector<32x128xf32>, vector<128x128xf32> -> vector<128x128xf32>
    %c0_3 = arith.constant 0 : index
    %c0_4 = arith.constant 0 : index
    %3 = vector.load %arg3[%c0_3, %c0_4] : memref<1x128xf32, #tpu.memory_space<vmem>>, vector<1x128xf32>
    %4 = vector.broadcast %3 : vector<1x128xf32> to vector<128x128xf32>
    %5 = arith.addf %2, %4 : vector<128x128xf32>
    %c0_5 = arith.constant 0 : index
    %c0_6 = arith.constant 0 : index
    %6 = vector.load %arg4[%c0_5, %c0_6] : memref<128x128xf32, #tpu.memory_space<vmem>>, vector<128x128xf32>
    tpu.vector_store %arg4[%c0_5, %c0_6], %5 {strides = array<i32>} : memref<128x128xf32, #tpu.memory_space<vmem>>, vector<128x128xf32>,
    return
  }
  func.func @transform_0(%arg0: i32) -> (i32, i32) {
    %c0_i32 = arith.constant 0 : i32
    %c0_i32_0 = arith.constant 0 : i32
    return %arg0, %c0_i32 : i32, i32
  }
  func.func @transform_1(%arg0: i32) -> (i32, i32) {
    %c0_i32 = arith.constant 0 : i32
    %c0_i32_0 = arith.constant 0 : i32
    %c0_i32_1 = arith.constant 0 : i32
    return %c0_i32, %c0_i32_0 : i32, i32
  }
  func.func @transform_2(%arg0: i32) -> (i32, i32) {
    %c0_i32 = arith.constant 0 : i32
    %c0_i32_0 = arith.constant 0 : i32
    %c0_i32_1 = arith.constant 0 : i32
    return %c0_i32, %c0_i32_0 : i32, i32
  }
  func.func @transform_3(%arg0: i32) -> (i32, i32) {
    %c0_i32 = arith.constant 0 : i32
    %c0_i32_0 = arith.constant 0 : i32
    return %arg0, %c0_i32 : i32, i32
  }
}

</mosaic_0001>

<llo_original>
// kernel: tpu_custom_call.1
$region0: #{tpu_custom_call.1}
  #allocation0 [shape = 'u32[]', space=smem, size = 0x4, offset = 0x4, fixed_abs, tag = 'smem constant byte address 0x4 - core index']
  #allocation1 [shape = 'u32[72,128]{1,0:T(1,128)}', space=vmem, size = 0x9000, scoped, tag = 'internal scratch']
  %s0 = inlined_call_operand.vmem [shape: f32[128,32], index: 0, kind: input, shape index: {}]
  %s1 = inlined_call_operand.vmem [shape: f32[32,128], index: 1, kind: input, shape index: {}]
  %s2 = inlined_call_operand.vmem [shape: f32[1,128], index: 2, kind: input, shape index: {}]
  %s3 = inlined_call_operand.hbm [shape: f32[128,128], index: 3, kind: output, shape index: {}]
  %s4 = sld [smem:[#allocation0]]
  $region22: #{tpu_custom_call.1} parent=0
    _
  %s6 = ssub.s32 1, %s4
  %s7 = scalar_select 0, %s6, %s4
  $region1: #{tpu_custom_call.1} parent=0
    #allocation2 [shape = 'u8[65536]{0}', space=vmem, size = 0x10000, scoped, tag = 'output window, operand 0, single buffered']
    #allocation3 [shape = 's32[1]{0}', space=sflag, size = 0x4, scoped, tag = 'scoped memory for tpu_custom_call.1']
    %8 = vsyncpa [#allocation3], 0
    // Predicated region
    $region2: #{tpu_custom_call.1} parent=1 // pred_check
      _
    $region3: #{tpu_custom_call.1} parent=1 // pred_check_branch
      %10 = sbr.rel (0) target = $region5
    $region4: #{tpu_custom_call.1} parent=1 // pred_region
      _
    $region5: #{tpu_custom_call.1} parent=1 // pred_fallthru
      _
    // Predicated region
    $region6: #{tpu_custom_call.1} parent=1 // pred_check
      _
    $region7: #{tpu_custom_call.1} parent=1 // pred_check_branch
      %12 = sbr.rel (0) target = $region9
    $region8: #{tpu_custom_call.1} parent=1 // pred_region
      _
    $region9: #{tpu_custom_call.1} parent=1 // pred_fallthru
      _
    // Predicated region
    $region10: #{tpu_custom_call.1} parent=1 // pred_check
      _
    $region11: #{tpu_custom_call.1} parent=1 // pred_check_branch
      %14 = sbr.rel (0) target = $region13
    $region12: #{tpu_custom_call.1} parent=1 // pred_region
      _
    $region13: #{tpu_custom_call.1} parent=1 // pred_fallthru
      _
    %v15 = vld [vmem:[%s0] sm:$0xff]
    %v16 = vld [vmem:[%s0 + $0x8] sm:$0xff]
    %v17 = vld [vmem:[%s0 + $0x10] sm:$0xff]
    %v18 = vld [vmem:[%s0 + $0x18] sm:$0xff]
    %v19 = vld [vmem:[%s0 + $0x20] sm:$0xff]
    %v20 = vld [vmem:[%s0 + $0x28] sm:$0xff]
    %v21 = vld [vmem:[%s0 + $0x30] sm:$0xff]
    %v22 = vld [vmem:[%s0 + $0x38] sm:$0xff]
    %v23 = vld [vmem:[%s0 + $0x40] sm:$0xff]
    %v24 = vld [vmem:[%s0 + $0x48] sm:$0xff]
    %v25 = vld [vmem:[%s0 + $0x50] sm:$0xff]
    %v26 = vld [vmem:[%s0 + $0x58] sm:$0xff]
    %v27 = vld [vmem:[%s0 + $0x60] sm:$0xff]
    %v28 = vld [vmem:[%s0 + $0x68] sm:$0xff]
    %v29 = vld [vmem:[%s0 + $0x70] sm:$0xff]
    %v30 = vld [vmem:[%s0 + $0x78] sm:$0xff]
    %v31 = vld [vmem:[%s1] sm:$0xff]
    %v32 = vld [vmem:[%s1 + $0x8] sm:$0xff]
    %v33 = vld [vmem:[%s1 + $0x10] sm:$0xff]
    %v34 = vld [vmem:[%s1 + $0x18] sm:$0xff]
    %v35 = vld [vmem:[%s2] sm:$0x1]
    %v37 = vperm.slane %v35, 0
    %vm39 = vcmask 261120
    %v41 = vsel %vm39, %v15, 0
    %v44 = vsel %vm39, %v16, 0
    %v47 = vsel %vm39, %v17, 0
    %v50 = vsel %vm39, %v18, 0
    %v53 = vsel %vm39, %v19, 0
    %v56 = vsel %vm39, %v20, 0
    %v59 = vsel %vm39, %v21, 0
    %v62 = vsel %vm39, %v22, 0
    %v65 = vsel %vm39, %v23, 0
    %v68 = vsel %vm39, %v24, 0
    %v71 = vsel %vm39, %v25, 0
    %v74 = vsel %vm39, %v26, 0
    %v77 = vsel %vm39, %v27, 0
    %v80 = vsel %vm39, %v28, 0
    %v83 = vsel %vm39, %v29, 0
    %v86 = vsel %vm39, %v30, 0
    %88 = vmatpush.msra.mxu0 0.0
    %89 = vmatpush.msra.mxu0 0.0
    %90 = vmatpush.msra.mxu0 0.0
    %91 = vmatpush.msra.mxu0 0.0
    %92 = vmatpush.msra.mxu0 0.0
    %93 = vmatpush.msra.mxu0 0.0
    %94 = vmatpush.msra.mxu0 0.0
    %95 = vmatpush.msra.mxu0 0.0
    %96 = vmatpush.msra.mxu0 0.0
    %97 = vmatpush.msra.mxu0 0.0
    %98 = vmatpush.msra.mxu0 0.0
    %99 = vmatpush.msra.mxu0 0.0
    %100 = vmatpush.msra.mxu0 %v34
    %101 = vmatpush.msra.mxu0 %v33
    %102 = vmatpush.msra.mxu0 %v32
    %103 = vmatpush.msra.mxu0 %v31
    %104 = vmatmul.f32.gmra.mxu0 %v41
    %v105 = vpop.f32.mrf.mxu0
    %v106 = vadd.f32 %v37, %v105
    %107 = vmatmul.f32.gmra.mxu0 %v44
    %v108 = vpop.f32.mrf.mxu0
    %v109 = vadd.f32 %v37, %v108
    %110 = vmatmul.f32.gmra.mxu0 %v47
    %v111 = vpop.f32.mrf.mxu0
    %v112 = vadd.f32 %v37, %v111
    %113 = vmatmul.f32.gmra.mxu0 %v50
    %v114 = vpop.f32.mrf.mxu0
    %v115 = vadd.f32 %v37, %v114
    %116 = vmatmul.f32.gmra.mxu0 %v53
    %v117 = vpop.f32.mrf.mxu0
    %v118 = vadd.f32 %v37, %v117
    %119 = vmatmul.f32.gmra.mxu0 %v56
    %v120 = vpop.f32.mrf.mxu0
    %v121 = vadd.f32 %v37, %v120
    %122 = vmatmul.f32.gmra.mxu0 %v59
    %v123 = vpop.f32.mrf.mxu0
    %v124 = vadd.f32 %v37, %v123
    %125 = vmatmul.f32.gmra.mxu0 %v62
    %v126 = vpop.f32.mrf.mxu0
    %v127 = vadd.f32 %v37, %v126
    %128 = vmatmul.f32.gmra.mxu0 %v65
    %v129 = vpop.f32.mrf.mxu0
    %v130 = vadd.f32 %v37, %v129
    %131 = vmatmul.f32.gmra.mxu0 %v68
    %v132 = vpop.f32.mrf.mxu0
    %v133 = vadd.f32 %v37, %v132
    %134 = vmatmul.f32.gmra.mxu0 %v71
    %v135 = vpop.f32.mrf.mxu0
    %v136 = vadd.f32 %v37, %v135
    %137 = vmatmul.f32.gmra.mxu0 %v74
    %v138 = vpop.f32.mrf.mxu0
    %v139 = vadd.f32 %v37, %v138
    %140 = vmatmul.f32.gmra.mxu0 %v77
    %v141 = vpop.f32.mrf.mxu0
    %v142 = vadd.f32 %v37, %v141
    %143 = vmatmul.f32.gmra.mxu0 %v80
    %v144 = vpop.f32.mrf.mxu0
    %v145 = vadd.f32 %v37, %v144
    %146 = vmatmul.f32.gmra.mxu0 %v83
    %v147 = vpop.f32.mrf.mxu0
    %v148 = vadd.f32 %v37, %v147
    %149 = vmatmul.f32.gmra.mxu0 %v86
    %v150 = vpop.f32.mrf.mxu0
    %v151 = vadd.f32 %v37, %v150
    %152 = vdwg.mxu0
    %153 = vst [vmem:[#allocation2] sm:$0xff] %v106
    %154 = vst [vmem:[#allocation2 + $0x8] sm:$0xff] %v109
    %155 = vst [vmem:[#allocation2 + $0x10] sm:$0xff] %v112
    %156 = vst [vmem:[#allocation2 + $0x18] sm:$0xff] %v115
    %157 = vst [vmem:[#allocation2 + $0x20] sm:$0xff] %v118
    %158 = vst [vmem:[#allocation2 + $0x28] sm:$0xff] %v121
    %159 = vst [vmem:[#allocation2 + $0x30] sm:$0xff] %v124
    %160 = vst [vmem:[#allocation2 + $0x38] sm:$0xff] %v127
    %161 = vst [vmem:[#allocation2 + $0x40] sm:$0xff] %v130
    %162 = vst [vmem:[#allocation2 + $0x48] sm:$0xff] %v133
    %163 = vst [vmem:[#allocation2 + $0x50] sm:$0xff] %v136
    %164 = vst [vmem:[#allocation2 + $0x58] sm:$0xff] %v139
    %165 = vst [vmem:[#allocation2 + $0x60] sm:$0xff] %v142
    %166 = vst [vmem:[#allocation2 + $0x68] sm:$0xff] %v145
    %167 = vst [vmem:[#allocation2 + $0x70] sm:$0xff] %v148
    %168 = vst [vmem:[#allocation2 + $0x78] sm:$0xff] %v151
    // Predicated region
    $region14: #{tpu_custom_call.1} parent=1 // pred_check
      _
    $region15: #{tpu_custom_call.1} parent=1 // pred_check_branch
      %170 = sbr.rel (0) target = $region17
    $region16: #{tpu_custom_call.1} parent=1 // pred_region
      %172 = vsyncadd [#allocation3], 0
      %s173 = sshll.u32 [#allocation2], 4
      %s174 = int_to_ptr.vmem [resolvable:$true] %s173
      %s175 = sshll.u32 %s3, 4
      %s176 = int_to_ptr.hbm [resolvable:$true] %s175
      %181 = dma.vmem_to_hbm [thread:$0]  %s174, 2048, %s176, [#allocation3], 128, 128, 8
    $region17: #{tpu_custom_call.1} parent=1 // pred_fallthru
      _
    // Predicated region
    $region18: #{tpu_custom_call.1} parent=1 // pred_check
      _
    $region19: #{tpu_custom_call.1} parent=1 // pred_check_branch
      %183 = sbr.rel (0) target = $region21
    $region20: #{tpu_custom_call.1} parent=1 // pred_region
      %185 = dma.done [#allocation3], 2048
    $region21: #{tpu_custom_call.1} parent=1 // pred_fallthru
      _
    %186 = vsyncpa [#allocation3], 1

</llo_original>
